<compile_context>
chip_gen: v5e
topology: v5e:2x2
jax: 0.10.0
libtpu: 0.0.40
codegen_flags: <defaults>
</compile_context>

<pallas_src>
import functools

import jax
import jax.numpy as jnp
from jax.experimental import pallas as pl
from jax.experimental.pallas import tpu as pltpu

_SCALE = 3.13482
_LANES = 128


def _act_fun_kernel(x_ref, o_ref, *, compute_dtype):
    # (sigmoid(x) - 0.5) * 2 * 3.13482 == 3.13482 * tanh(x / 2)   (exact)
    x = x_ref[...].astype(compute_dtype)
    o_ref[...] = (_SCALE * jnp.tanh(0.5 * x)).astype(o_ref.dtype)


def _cdiv(a, b):
    return -(-a // b)


def _round_up(a, b):
    return _cdiv(a, b) * b


def _device_kind():
    try:
        return jax.devices()[0].device_kind.lower()
    except Exception:  # pragma: no cover - defensive
        return ""


def _native_sublane(itemsize):
    # Native sublane multiple: 8 for f32, 16 for bf16/f16, 32 for int8/fp8.
    return max(8, 32 // max(itemsize, 1))


def _compute_dtype_for(orig_dtype, kind):
    # bf16 VPU/EUP exist on v6e/v7x; v5e (and unknown parts) upcast to f32.
    if orig_dtype == jnp.bfloat16 and ("v6" in kind or "v7" in kind):
        return jnp.bfloat16
    return jnp.float32


def _pick_tile_rows(rows, itemsize, kind):
    """Per-generation row tile (kernel is HBM-bound; amortize ~0.35us/step)."""
    if "v5" in kind:
        tm, vmem_limit = 4096, None                 # 2 MiB f32 blocks, 16 MiB scoped default
    elif "v6" in kind:
        tm, vmem_limit = 8192, None                 # 4 MiB f32 blocks, 16 MiB buffers < 32 MiB default
    elif "v7" in kind:
        tm, vmem_limit = 16384, 48 * 1024 * 1024    # 8 MiB blocks, 32 MiB buffers < 48 MiB < 64 MiB phys
    else:
        tm, vmem_limit = 4096, None
    # Keep block byte-size roughly constant for narrower dtypes (bf16/int8).
    if itemsize < 4:
        tm *= 4 // max(itemsize, 1)

    sub = _native_sublane(itemsize)
    tm = min(tm, _round_up(rows, sub))
    tm = max(tm, sub)

    # v7x: 2 TensorCores share the ('parallel',) grid axis -- prefer an even
    # number of grid steps so neither core idles on the final block.
    if "v7" in kind:
        steps = _cdiv(rows, tm)
        if steps > 1 and steps % 2 == 1:
            tm = max(sub, _round_up(_cdiv(rows, steps + 1), sub))
    return tm, vmem_limit


def _act_fun_2d(x2d, *, tile_rows=None, donate_input=False):
    """Run the kernel over a lane-dense (rows, 128) slab."""
    rows, lanes = x2d.shape
    orig_dtype = x2d.dtype
    itemsize = jnp.dtype(orig_dtype).itemsize
    kind = _device_kind()

    if tile_rows is None:
        tm, vmem_limit = _pick_tile_rows(rows, itemsize, kind)
    else:
        sub = _native_sublane(itemsize)
        tm = max(sub, _round_up(int(tile_rows), sub))
        vmem_limit = None

    compute_dtype = _compute_dtype_for(orig_dtype, kind)
    kernel = functools.partial(_act_fun_kernel, compute_dtype=compute_dtype)

    grid = (_cdiv(rows, tm),)  # partial last block handled by Pallas
    n_elems = rows * lanes
    cost = pl.CostEstimate(
        flops=3 * n_elems,
        transcendentals=n_elems,
        bytes_accessed=2 * n_elems * itemsize,
    )

    return pl.pallas_call(
        kernel,
        out_shape=jax.ShapeDtypeStruct((rows, lanes), orig_dtype),
        grid_spec=pltpu.PrefetchScalarGridSpec(
            num_scalar_prefetch=0,
            grid=grid,
            in_specs=[pl.BlockSpec((tm, lanes), lambda i: (i, 0))],
            out_specs=pl.BlockSpec((tm, lanes), lambda i: (i, 0)),
        ),
        compiler_params=pltpu.CompilerParams(
            dimension_semantics=("parallel",),
            vmem_limit_bytes=vmem_limit,
        ),
        cost_estimate=cost,
        # In-place update (halves peak HBM footprint) only when the caller
        # explicitly allows donating the input buffer.
        input_output_aliases=({0: 0} if donate_input else {}),
    )(x2d)


def act_fun(x, *, tile_rows=None, donate_input=False):
    """Elementwise (sigmoid(x) - 0.5) * 2 * 3.13482, computed in a Pallas kernel."""
    orig_shape = x.shape
    orig_dtype = x.dtype
    n = x.size
    if n == 0:
        return x

    lanes = _LANES
    n_head = (n // lanes) * lanes

    if n_head == n:
        # Lane-dense 2D slab; for typical flat/row-major activations this is a
        # metadata-only reshape (see module-level TODO about relayouts).
        x2d = jnp.reshape(x, (n // lanes, lanes))
        out2d = _act_fun_2d(x2d, tile_rows=tile_rows, donate_input=donate_input)
        return jnp.reshape(out2d, orig_shape)

    # Tail-only path: kernel over the 128-aligned prefix, tiny (<128 element)
    # tail in plain JAX. Avoids the old full-tensor pad + slice (2 extra HBM
    # passes on a bandwidth-bound op).
    flat = jnp.reshape(x, (-1,))
    tail = flat[n_head:]
    tail_out = (_SCALE * jnp.tanh(0.5 * tail.astype(jnp.float32))).astype(orig_dtype)
    if n_head == 0:
        return jnp.reshape(tail_out, orig_shape)
    head2d = jnp.reshape(flat[:n_head], (n_head // lanes, lanes))
    head_out = jnp.reshape(
        _act_fun_2d(head2d, tile_rows=tile_rows, donate_input=False), (-1,)
    )
    return jnp.reshape(jnp.concatenate([head_out, tail_out]), orig_shape)


def _ref(x):
    return (jax.nn.sigmoid(x.astype(jnp.float32)) - 0.5) * 2.0 * 3.13482


if __name__ == "__main__":
    key = jax.random.PRNGKey(0)

    # NCHW input, small shape, 128-aligned element count (2*4*16*16 = 2048).
    x = jax.random.normal(key, (2, 4, 16, 16), dtype=jnp.float32)
    y = jax.block_until_ready(act_fun(x))
    y_ref = _ref(x)
    assert y.shape == x.shape and y.dtype == x.dtype
    assert jnp.allclose(y, y_ref, atol=1e-5, rtol=1e-5)

    # Unaligned element count (103*10 = 1030 = 8*128 + 6): exercises the
    # tail-only path (kernel over the aligned prefix + plain-JAX tail).
    key2 = jax.random.PRNGKey(0)
    x_u = jax.random.normal(key2, (103, 10), dtype=jnp.float32)
    y_u = jax.block_until_ready(act_fun(x_u))
    y_u_ref = _ref(x_u)
    assert y_u.shape == x_u.shape and y_u.dtype == x_u.dtype
    assert jnp.allclose(y_u, y_u_ref, atol=1e-5, rtol=1e-5)

    print("KERNEL_OK")
</pallas_src>

<mosaic_0001>
module attributes {stable_mosaic.version = 11 : i64} {
  func.func @_act_fun_kernel(%arg0: i32, %arg1: memref<16x128xf32, #tpu.memory_space<vmem>>, %arg2: memref<16x128xf32, #tpu.memory_space<vmem>>) attributes {dimension_semantics = [#tpu.dimension_semantics<parallel>], iteration_bounds = array<i64: 1>, scalar_prefetch = 0 : i64, scratch_operands = 0 : i64, tpu.core_type = #tpu.core_type<tc>, window_params = [{transform_indices = @transform_0, window_bounds = array<i64: 16, 128>}, {transform_indices = @transform_1, window_bounds = array<i64: 16, 128>}]} {
    %c0 = arith.constant 0 : index
    %c0_0 = arith.constant 0 : index
    %0 = vector.load %arg1[%c0, %c0_0] : memref<16x128xf32, #tpu.memory_space<vmem>>, vector<16x128xf32>
    %cst = arith.constant 5.000000e-01 : f32
    %1 = vector.broadcast %cst : f32 to vector<16x128xf32>
    %2 = arith.mulf %1, %0 : vector<16x128xf32>
    %3 = math.tanh %2 : vector<16x128xf32>
    %cst_1 = arith.constant 3.134820e+00 : f32
    %4 = vector.broadcast %cst_1 : f32 to vector<16x128xf32>
    %5 = arith.mulf %4, %3 : vector<16x128xf32>
    %c0_2 = arith.constant 0 : index
    %c0_3 = arith.constant 0 : index
    %6 = vector.load %arg2[%c0_2, %c0_3] : memref<16x128xf32, #tpu.memory_space<vmem>>, vector<16x128xf32>
    tpu.vector_store %arg2[%c0_2, %c0_3], %5 {strides = array<i32>} : memref<16x128xf32, #tpu.memory_space<vmem>>, vector<16x128xf32>,
    return
  }
  func.func @transform_0(%arg0: i32) -> (i32, i32) {
    %c0_i32 = arith.constant 0 : i32
    %c0_i32_0 = arith.constant 0 : i32
    return %arg0, %c0_i32 : i32, i32
  }
  func.func @transform_1(%arg0: i32) -> (i32, i32) {
    %c0_i32 = arith.constant 0 : i32
    %c0_i32_0 = arith.constant 0 : i32
    return %arg0, %c0_i32 : i32, i32
  }
}

</mosaic_0001>

<llo_original>
// kernel: tpu_custom_call.1
$region0: #{tpu_custom_call.1}
  #allocation0 [shape = 'u32[]', space=smem, size = 0x4, offset = 0x4, fixed_abs, tag = 'smem constant byte address 0x4 - core index']
  #allocation1 [shape = 'u32[72,128]{1,0:T(1,128)}', space=vmem, size = 0x9000, scoped, tag = 'internal scratch']
  %s0 = inlined_call_operand.hbm [shape: f32[16,128], index: 0, kind: input, shape index: {}]
  %s1 = inlined_call_operand.hbm [shape: f32[16,128], index: 1, kind: output, shape index: {}]
  %s2 = sld [smem:[#allocation0]]
  $region18: #{tpu_custom_call.1} parent=0
    _
  %s4 = ssub.s32 1, %s2
  %s5 = scalar_select 0, %s4, %s2
  $region1: #{tpu_custom_call.1} parent=0
    #allocation2 [shape = 'u8[8192]{0}', space=vmem, size = 0x2000, scoped, tag = 'input window, operand 0, single buffered']
    #allocation3 [shape = 's32[1]{0}', space=sflag, size = 0x4, scoped, tag = 'scoped memory for tpu_custom_call.1']
    #allocation4 [shape = 's32[1]{0}', space=sflag, size = 0x4, scoped, tag = 'scoped memory for tpu_custom_call.1']
    #allocation5 [shape = 'u8[8192]{0}', space=vmem, size = 0x2000, scoped, tag = 'output window, operand 0, single buffered']
    %6 = vsyncpa [#allocation3], 0
    %7 = vsyncpa [#allocation4], 0
    // Predicated region
    $region2: #{tpu_custom_call.1} parent=1 // pred_check
      _
    $region3: #{tpu_custom_call.1} parent=1 // pred_check_branch
      %9 = sbr.rel (0) target = $region5
    $region4: #{tpu_custom_call.1} parent=1 // pred_region
      %11 = vsyncadd [#allocation3], 0
      %s12 = sshll.u32 %s0, 4
      %s13 = int_to_ptr.hbm [resolvable:$true] %s12
      %s14 = sshll.u32 [#allocation2], 4
      %s15 = int_to_ptr.vmem [resolvable:$true] %s14
      %20 = dma.hbm_to_vmem [thread:$0]  %s13, 256, %s15, [#allocation3], 128, 128, 8
    $region5: #{tpu_custom_call.1} parent=1 // pred_fallthru
      _
    // Predicated region
    $region6: #{tpu_custom_call.1} parent=1 // pred_check
      _
    $region7: #{tpu_custom_call.1} parent=1 // pred_check_branch
      %22 = sbr.rel (0) target = $region9
    $region8: #{tpu_custom_call.1} parent=1 // pred_region
      %24 = dma.done [#allocation3], 256
    $region9: #{tpu_custom_call.1} parent=1 // pred_fallthru
      _
    %v25 = vld [vmem:[#allocation2] sm:$0xff]
    %v26 = vld [vmem:[#allocation2 + $0x8] sm:$0xff]
    %v27 = vmul.f32 %v25, 0.5
    %v28 = vmul.f32 %v26, 0.5
    %v29 = vtanh.pop %v27
    %v30 = vtanh.pop %v28
    %v31 = vmul.f32 %v29, 3.13482
    %v32 = vmul.f32 %v30, 3.13482
    %33 = vst [vmem:[#allocation5] sm:$0xff] %v31
    %34 = vst [vmem:[#allocation5 + $0x8] sm:$0xff] %v32
    // Predicated region
    $region10: #{tpu_custom_call.1} parent=1 // pred_check
      _
    $region11: #{tpu_custom_call.1} parent=1 // pred_check_branch
      %36 = sbr.rel (0) target = $region13
    $region12: #{tpu_custom_call.1} parent=1 // pred_region
      %38 = vsyncadd [#allocation4], 0
      %s39 = sshll.u32 [#allocation5], 4
      %s40 = int_to_ptr.vmem [resolvable:$true] %s39
      %s41 = sshll.u32 %s1, 4
      %s42 = int_to_ptr.hbm [resolvable:$true] %s41
      %47 = dma.vmem_to_hbm [thread:$0]  %s40, 256, %s42, [#allocation4], 128, 128, 8
    $region13: #{tpu_custom_call.1} parent=1 // pred_fallthru
      _
    // Predicated region
    $region14: #{tpu_custom_call.1} parent=1 // pred_check
      _
    $region15: #{tpu_custom_call.1} parent=1 // pred_check_branch
      %49 = sbr.rel (0) target = $region17
    $region16: #{tpu_custom_call.1} parent=1 // pred_region
      %51 = dma.done [#allocation4], 256
    $region17: #{tpu_custom_call.1} parent=1 // pred_fallthru
      _
    %52 = vsyncpa [#allocation3], 1
    %53 = vsyncpa [#allocation4], 1

</llo_original>
